<compile_context>
chip_gen: v6e
topology: v6e:2x2x1
jax: 0.10.0
libtpu: 0.0.40
codegen_flags: <defaults>
</compile_context>

<pallas_src>
import functools

import jax
import jax.numpy as jnp
from jax.experimental import pallas as pl
from jax.experimental.pallas import tpu as pltpu

_LANE = 128
# Scoped-VMEM budget: safe on v7x (64 MiB physical per TC) and leaves plenty of
# headroom on v5e/v6e (128 MiB). Worst-case working set here is ~18 MiB.
_VMEM_LIMIT_BYTES = 48 * 1024 * 1024
# Keep the projected features VMEM-resident (fetched once) when they fit this budget.
_RESIDENT_BYTES = 8 * 1024 * 1024


def _round_up(x, m):
    return ((x + m - 1) // m) * m


def _pad2(x, shape):
    return jnp.pad(x, [(0, s - d) for s, d in zip(shape, x.shape)])


def _divisor_tile(n_pad, target):
    """Largest multiple of 128 that divides n_pad and is <= target."""
    t = min(target, n_pad)
    t = max(_LANE, (t // _LANE) * _LANE)
    while n_pad % t:
        t -= _LANE
    return t


def _choose_node_tiling(n):
    """Pick (n_pad, tm, tk) for the O(N^2) aggregation.

    tm is capped at n_pad/2 (when possible) so the 'parallel' row axis keeps >= 2
    blocks for v7x's two TensorCores; tk goes up to 2048 for a deep, HBM-friendly
    reduction block. Both are multiples of 128 (v5e-safe)."""
    n_pad = _round_up(max(n, 1), _LANE)
    tm_target = n_pad // 2 if n_pad >= 2 * _LANE else n_pad
    tm = _divisor_tile(n_pad, min(1024, tm_target))
    tk = _divisor_tile(n_pad, 2048)
    return n_pad, tm, tk


# ---------------------------------------------------------------------------
# Kernel 1: row-tiled dense feature projection  out = X @ W   (bf16 output)
# ---------------------------------------------------------------------------
def _project_kernel(x_ref, w_ref, o_ref):
    o_ref[...] = jnp.dot(
        x_ref[...], w_ref[...], preferred_element_type=jnp.float32
    ).astype(o_ref.dtype)


def _project(x, w):
    n_pad, f_in = x.shape
    f_out = w.shape[1]
    tm = _divisor_tile(n_pad, 1024)  # big row tile; operands here are tiny
    return pl.pallas_call(
        _project_kernel,
        out_shape=jax.ShapeDtypeStruct((n_pad, f_out), jnp.bfloat16),
        grid_spec=pltpu.PrefetchScalarGridSpec(
            num_scalar_prefetch=0,
            grid=(n_pad // tm,),
            in_specs=[
                pl.BlockSpec((tm, f_in), lambda i: (i, 0)),
                pl.BlockSpec((f_in, f_out), lambda i: (0, 0)),
            ],
            out_specs=pl.BlockSpec((tm, f_out), lambda i: (i, 0)),
        ),
        compiler_params=pltpu.CompilerParams(
            dimension_semantics=("parallel",),
            vmem_limit_bytes=_VMEM_LIMIT_BYTES,
        ),
        cost_estimate=pl.CostEstimate(
            flops=2 * n_pad * f_in * f_out,
            transcendentals=0,
            bytes_accessed=4 * (n_pad * f_in + f_in * f_out) + 2 * n_pad * f_out,
        ),
    )(x, w)


# ---------------------------------------------------------------------------
# Kernel 2: layer-1 aggregation fused with the layer-2 projection
#   acc  = A_hat @ XW1 + b1          (bf16 x bf16 MXU, f32 accumulate)
#   o    = leaky_relu(acc) @ W2      (epilogue matmul, bf16 output)
# ---------------------------------------------------------------------------
def _agg1_kernel(a_ref, xw_ref, b1_ref, w2_ref, o_ref, acc_ref, *, tk, xw_resident):
    k = pl.program_id(1)

    @pl.when(k == 0)
    def _():
        # Fold the layer-1 bias into the accumulator init.
        acc_ref[...] = jnp.broadcast_to(b1_ref[...], acc_ref.shape)

    if xw_resident:
        xw = xw_ref[pl.ds(pl.multiple_of(k * tk, tk), tk), :]
    else:
        xw = xw_ref[...]
    acc_ref[...] += jnp.dot(a_ref[...], xw, preferred_element_type=jnp.float32)

    @pl.when(k == pl.num_programs(1) - 1)
    def _():
        h = acc_ref[...]
        h = jnp.maximum(h, 0.01 * h)  # F.leaky_relu default slope
        # TODO(synk): dropout(p=0.7) is identity in eval mode; training-mode masking
        # (pltpu.prng_seed / prng_random_bits) not implemented.
        hw2 = jnp.dot(
            h.astype(jnp.bfloat16), w2_ref[...], preferred_element_type=jnp.float32
        )
        o_ref[...] = hw2.astype(o_ref.dtype)


def _aggregate_fused(a_bf16, xw1, b1, w2, tm, tk):
    n_pad = a_bf16.shape[0]
    hid = xw1.shape[1]
    fout = w2.shape[1]
    ni, nk = n_pad // tm, n_pad // tk
    xw_resident = (n_pad * hid * 2) <= _RESIDENT_BYTES
    if xw_resident:
        xw_spec = pl.BlockSpec((n_pad, hid), lambda i, k: (0, 0))
        xw_bytes = 2 * n_pad * hid
    else:
        xw_spec = pl.BlockSpec((tk, hid), lambda i, k: (k, 0))
        xw_bytes = 2 * n_pad * hid * ni
    kernel = functools.partial(_agg1_kernel, tk=tk, xw_resident=xw_resident)
    return pl.pallas_call(
        kernel,
        out_shape=jax.ShapeDtypeStruct((n_pad, fout), jnp.bfloat16),
        grid_spec=pltpu.PrefetchScalarGridSpec(
            num_scalar_prefetch=0,
            grid=(ni, nk),
            in_specs=[
                pl.BlockSpec((tm, tk), lambda i, k: (i, k)),      # A_hat (bf16)
                xw_spec,                                          # XW1   (bf16)
                pl.BlockSpec((1, hid), lambda i, k: (0, 0)),      # b1    (f32)
                pl.BlockSpec((hid, fout), lambda i, k: (0, 0)),   # W2    (bf16)
            ],
            out_specs=pl.BlockSpec((tm, fout), lambda i, k: (i, 0)),
            scratch_shapes=[pltpu.VMEM((tm, hid), jnp.float32)],
        ),
        compiler_params=pltpu.CompilerParams(
            dimension_semantics=("parallel", "arbitrary"),
            vmem_limit_bytes=_VMEM_LIMIT_BYTES,
        ),
        cost_estimate=pl.CostEstimate(
            flops=2 * n_pad * n_pad * hid + 2 * n_pad * hid * fout,
            transcendentals=0,
            bytes_accessed=(2 * n_pad * n_pad + xw_bytes + 4 * hid
                            + 2 * hid * fout + 2 * n_pad * fout),
        ),
    )(a_bf16, xw1, b1, w2)


# ---------------------------------------------------------------------------
# Kernel 3: final aggregation  out = A_hat @ HW2 + b2   (f32 output)
# ---------------------------------------------------------------------------
def _agg2_kernel(a_ref, hw_ref, b2_ref, o_ref, acc_ref, *, tk, hw_resident):
    k = pl.program_id(1)

    @pl.when(k == 0)
    def _():
        acc_ref[...] = jnp.broadcast_to(b2_ref[...], acc_ref.shape)

    if hw_resident:
        hw = hw_ref[pl.ds(pl.multiple_of(k * tk, tk), tk), :]
    else:
        hw = hw_ref[...]
    acc_ref[...] += jnp.dot(a_ref[...], hw, preferred_element_type=jnp.float32)

    @pl.when(k == pl.num_programs(1) - 1)
    def _():
        o_ref[...] = acc_ref[...].astype(o_ref.dtype)


def _aggregate_final(a_bf16, hw2, b2, tm, tk):
    n_pad = a_bf16.shape[0]
    fout = hw2.shape[1]
    ni, nk = n_pad // tm, n_pad // tk
    hw_resident = (n_pad * fout * 2) <= _RESIDENT_BYTES
    if hw_resident:
        hw_spec = pl.BlockSpec((n_pad, fout), lambda i, k: (0, 0))
        hw_bytes = 2 * n_pad * fout
    else:
        hw_spec = pl.BlockSpec((tk, fout), lambda i, k: (k, 0))
        hw_bytes = 2 * n_pad * fout * ni
    kernel = functools.partial(_agg2_kernel, tk=tk, hw_resident=hw_resident)
    return pl.pallas_call(
        kernel,
        out_shape=jax.ShapeDtypeStruct((n_pad, fout), jnp.float32),
        grid_spec=pltpu.PrefetchScalarGridSpec(
            num_scalar_prefetch=0,
            grid=(ni, nk),
            in_specs=[
                pl.BlockSpec((tm, tk), lambda i, k: (i, k)),    # A_hat (bf16)
                hw_spec,                                        # HW2   (bf16)
                pl.BlockSpec((1, fout), lambda i, k: (0, 0)),   # b2    (f32)
            ],
            out_specs=pl.BlockSpec((tm, fout), lambda i, k: (i, 0)),
            scratch_shapes=[pltpu.VMEM((tm, fout), jnp.float32)],
        ),
        compiler_params=pltpu.CompilerParams(
            dimension_semantics=("parallel", "arbitrary"),
            vmem_limit_bytes=_VMEM_LIMIT_BYTES,
        ),
        cost_estimate=pl.CostEstimate(
            flops=2 * n_pad * n_pad * fout,
            transcendentals=0,
            bytes_accessed=(2 * n_pad * n_pad + hw_bytes + 4 * fout
                            + 4 * n_pad * fout),
        ),
    )(a_bf16, hw2, b2)


# ---------------------------------------------------------------------------
# Full forward pass
# ---------------------------------------------------------------------------
def gcn_forward_pallas(a_hat, x, w1, b1, w2, b2):
    n, in_dim = x.shape
    hid_dim = w1.shape[1]
    out_dim = w2.shape[1]

    n_pad, tm, tk = _choose_node_tiling(n)
    fin_pad = _round_up(in_dim, _LANE)
    hid_pad = _round_up(hid_dim, _LANE)
    fout_pad = _round_up(out_dim, _LANE)

    # Zero-padding keeps semantics exact: padded A_hat rows/cols and padded feature
    # columns contribute nothing to the real outputs sliced out below. A_hat is cast
    # to bf16 *before* padding so the dominant N x N tensor never has an f32 copy.
    a_p = _pad2(a_hat.astype(jnp.bfloat16), (n_pad, n_pad))
    x_p = _pad2(x.astype(jnp.float32), (n_pad, fin_pad))
    w1_p = _pad2(w1.astype(jnp.float32), (fin_pad, hid_pad))
    b1_p = _pad2(b1.reshape(1, -1).astype(jnp.float32), (1, hid_pad))
    w2_p = _pad2(w2.astype(jnp.float32), (hid_pad, fout_pad)).astype(jnp.bfloat16)
    b2_p = _pad2(b2.reshape(1, -1).astype(jnp.float32), (1, fout_pad))

    xw1 = _project(x_p, w1_p)                                 # [n_pad, hid_pad] bf16
    hw2 = _aggregate_fused(a_p, xw1, b1_p, w2_p, tm, tk)      # layer 1 + H@W2, bf16
    out = _aggregate_final(a_p, hw2, b2_p, tm, tk)            # layer 2, f32
    return out[:n, :out_dim]


def build_normalized_adjacency(edge_index, num_nodes):
    """Dense A_hat = D^{-1/2} (A + I) D^{-1/2}, matching PyG GCNConv.

    edge_index: int32 [2, E], row 0 = source, row 1 = target.
    A[target, source] = 1 plus self loops; degrees are row sums after self loops.
    """
    src, dst = edge_index[0], edge_index[1]
    adj = jnp.zeros((num_nodes, num_nodes), jnp.float32)
    adj = adj.at[dst, src].add(1.0)
    adj = adj + jnp.eye(num_nodes, dtype=jnp.float32)  # add self loops
    deg = jnp.sum(adj, axis=1)
    deg_inv_sqrt = jnp.where(deg > 0, 1.0 / jnp.sqrt(deg), 0.0)
    return deg_inv_sqrt[:, None] * adj * deg_inv_sqrt[None, :]


def glorot(key, fan_in, fan_out):
    limit = jnp.sqrt(6.0 / (fan_in + fan_out))
    return jax.random.uniform(
        key, (fan_in, fan_out), jnp.float32, minval=-limit, maxval=limit
    )


if __name__ == "__main__":
    key = jax.random.PRNGKey(0)
    k_x, k_e, k_w1, k_w2 = jax.random.split(key, 4)

    # Small deterministic problem: 16 nodes, input_dim=8, hid_dim=32, out_dim=16.
    num_nodes, input_dim, hid_dim, out_dim = 16, 8, 32, 16
    num_edges = 40

    x = jax.random.normal(k_x, (num_nodes, input_dim), jnp.float32)
    edge_index = jax.random.randint(k_e, (2, num_edges), 0, num_nodes, jnp.int32)
    batch = jnp.zeros((num_nodes,), jnp.int32)  # unused by forward(), kept for parity

    # Deterministic parameter init (GCNConv: glorot weight, zero bias).
    w1 = glorot(k_w1, input_dim, hid_dim)
    b1 = jnp.zeros((1, hid_dim), jnp.float32)
    w2 = glorot(k_w2, hid_dim, out_dim)
    b2 = jnp.zeros((1, out_dim), jnp.float32)

    a_hat = build_normalized_adjacency(edge_index, num_nodes)

    node_emb = gcn_forward_pallas(a_hat, x, w1, b1, w2, b2)
    node_emb = jax.block_until_ready(node_emb)

    # Pure-JAX reference with the same bf16 quantization points as the kernels
    # (A_hat, X@W1, and H@W2 are streamed in bf16; accumulation is f32 in both paths).
    def q(v):
        return v.astype(jnp.bfloat16).astype(jnp.float32)

    a_q = q(a_hat)
    h_ref = a_q @ q(x @ w1) + b1
    h_ref = jnp.where(h_ref > 0, h_ref, 0.01 * h_ref)
    hw2_q = q(q(h_ref) @ q(w2))
    ref = a_q @ hw2_q + b2

    assert jnp.allclose(node_emb, ref, atol=5e-3, rtol=5e-3), (
        float(jnp.max(jnp.abs(node_emb - ref)))
    )

    print("KERNEL_OK")
</pallas_src>

<mosaic_0001>
module attributes {stable_mosaic.version = 11 : i64} {
  func.func @_project_kernel(%arg0: i32, %arg1: memref<128x128xf32, #tpu.memory_space<vmem>>, %arg2: memref<128x128xf32, #tpu.memory_space<vmem>>, %arg3: memref<128x128xbf16, #tpu.memory_space<vmem>>) attributes {dimension_semantics = [#tpu.dimension_semantics<parallel>], iteration_bounds = array<i64: 1>, scalar_prefetch = 0 : i64, scratch_operands = 0 : i64, tpu.core_type = #tpu.core_type<tc>, window_params = [{transform_indices = @transform_0, window_bounds = array<i64: 128, 128>}, {pipeline_mode = #tpu.pipeline_mode<synchronous>, transform_indices = @transform_1, window_bounds = array<i64: 128, 128>}, {transform_indices = @transform_2, window_bounds = array<i64: 128, 128>}]} {
    %c0 = arith.constant 0 : index
    %c0_0 = arith.constant 0 : index
    %0 = vector.load %arg1[%c0, %c0_0] : memref<128x128xf32, #tpu.memory_space<vmem>>, vector<128x128xf32>
    %c0_1 = arith.constant 0 : index
    %c0_2 = arith.constant 0 : index
    %1 = vector.load %arg2[%c0_1, %c0_2] : memref<128x128xf32, #tpu.memory_space<vmem>>, vector<128x128xf32>
    %cst = arith.constant dense<0.000000e+00> : vector<128x128xf32>
    %2 = tpu.matmul %0, %1, %cst {dimension_numbers = #tpu.dot_dimension_numbers<[1], [0], [0], [1], [0, 0, 1, 1], [], []>} : vector<128x128xf32>, vector<128x128xf32>, vector<128x128xf32> -> vector<128x128xf32>
    %3 = arith.truncf %2 : vector<128x128xf32> to vector<128x128xbf16>
    %c0_3 = arith.constant 0 : index
    %c0_4 = arith.constant 0 : index
    %4 = vector.load %arg3[%c0_3, %c0_4] : memref<128x128xbf16, #tpu.memory_space<vmem>>, vector<128x128xbf16>
    tpu.vector_store %arg3[%c0_3, %c0_4], %3 {strides = array<i32>} : memref<128x128xbf16, #tpu.memory_space<vmem>>, vector<128x128xbf16>,
    return
  }
  func.func @transform_0(%arg0: i32) -> (i32, i32) {
    %c0_i32 = arith.constant 0 : i32
    %c0_i32_0 = arith.constant 0 : i32
    return %arg0, %c0_i32 : i32, i32
  }
  func.func @transform_1(%arg0: i32) -> (i32, i32) {
    %c0_i32 = arith.constant 0 : i32
    %c0_i32_0 = arith.constant 0 : i32
    %c0_i32_1 = arith.constant 0 : i32
    return %c0_i32, %c0_i32_0 : i32, i32
  }
  func.func @transform_2(%arg0: i32) -> (i32, i32) {
    %c0_i32 = arith.constant 0 : i32
    %c0_i32_0 = arith.constant 0 : i32
    return %arg0, %c0_i32 : i32, i32
  }
}

</mosaic_0001>

<llo_original>
// kernel: tpu_custom_call.1
$region0: #{tpu_custom_call.1}
  #allocation0 [shape = 'u32[]', space=smem, size = 0x4, offset = 0x4, fixed_abs, tag = 'smem constant byte address 0x4 - core index']
  #allocation1 [shape = 'u32[144,128]{1,0:T(1,128)}', space=vmem, size = 0x12000, scoped, tag = 'internal scratch']
  %s0 = inlined_call_operand.hbm [shape: f32[128,128], index: 0, kind: input, shape index: {}]
  %s1 = inlined_call_operand.hbm [shape: f32[128,128], index: 1, kind: input, shape index: {}]
  %s2 = inlined_call_operand.hbm [shape: bf16[128,128], index: 2, kind: output, shape index: {}]
  %s3 = sld [smem:[#allocation0]]
  $region26: #{tpu_custom_call.1} parent=0
    _
  %s5 = ssub.s32 1, %s3
  %s6 = scalar_select 0, %s5, %s3
  $region1: #{tpu_custom_call.1} parent=0
    #allocation2 [shape = 'u8[65536]{0}', space=vmem, size = 0x10000, scoped, tag = 'input window, operand 0, single buffered']
    #allocation3 [shape = 's32[1]{0}', space=sflag, size = 0x4, scoped, tag = 'scoped memory for tpu_custom_call.1']
    #allocation4 [shape = 's32[1]{0}', space=sflag, size = 0x4, scoped, tag = 'scoped memory for tpu_custom_call.1']
    #allocation5 [shape = 'u8[65536]{0}', space=vmem, size = 0x10000, scoped, tag = 'input window, operand 1, single buffered']
    #allocation6 [shape = 's32[1]{0}', space=sflag, size = 0x4, scoped, tag = 'scoped memory for tpu_custom_call.1']
    #allocation7 [shape = 'u8[32768]{0}', space=vmem, size = 0x8000, scoped, tag = 'output window, operand 0, single buffered']
    %7 = vsyncpa [#allocation3], 0
    %8 = vsyncpa [#allocation6], 0
    %9 = vsyncpa [#allocation4], 0
    // Predicated region
    $region2: #{tpu_custom_call.1} parent=1 // pred_check
      _
    $region3: #{tpu_custom_call.1} parent=1 // pred_check_branch
      %11 = sbr.rel (0) target = $region5
    $region4: #{tpu_custom_call.1} parent=1 // pred_region
      %s13 = ssub.s32 2048, 2048
      %14 = vsyncadd [#allocation3], %s13
      %s15 = sshll.u32 [#allocation2], 4
      %s16 = int_to_ptr.vmem [resolvable:$true] %s15
      %21 = dma.hbm_to_vmem [thread:$0]  %s0, 2048, %s16, [#allocation3], 128, 128, 8
    $region5: #{tpu_custom_call.1} parent=1 // pred_fallthru
      _
    // Predicated region
    $region6: #{tpu_custom_call.1} parent=1 // pred_check
      _
    $region7: #{tpu_custom_call.1} parent=1 // pred_check_branch
      %23 = sbr.rel (0) target = $region9
    $region8: #{tpu_custom_call.1} parent=1 // pred_region
      %s25 = ssub.s32 2048, 2048
      %26 = vsyncadd [#allocation6], %s25
      %s27 = sshll.u32 [#allocation5], 4
      %s28 = int_to_ptr.vmem [resolvable:$true] %s27
      %33 = dma.hbm_to_vmem [thread:$0]  %s1, 2048, %s28, [#allocation6], 128, 128, 8
    $region9: #{tpu_custom_call.1} parent=1 // pred_fallthru
      _
    // Predicated region
    $region10: #{tpu_custom_call.1} parent=1 // pred_check
      _
    $region11: #{tpu_custom_call.1} parent=1 // pred_check_branch
      %35 = sbr.rel (0) target = $region13
    $region12: #{tpu_custom_call.1} parent=1 // pred_region
      %36 = dma.done [#allocation3], 2048
    $region13: #{tpu_custom_call.1} parent=1 // pred_fallthru
      _
    // Predicated region
    $region14: #{tpu_custom_call.1} parent=1 // pred_check
      _
    $region15: #{tpu_custom_call.1} parent=1 // pred_check_branch
      %38 = sbr.rel (0) target = $region17
    $region16: #{tpu_custom_call.1} parent=1 // pred_region
      %39 = dma.done [#allocation6], 2048
    $region17: #{tpu_custom_call.1} parent=1 // pred_fallthru
      _
    %v40 = vld [vmem:[#allocation2] sm:$0xff]
    %v41 = vld [vmem:[#allocation2 + $0x8] sm:$0xff]
    %v42 = vld [vmem:[#allocation2 + $0x10] sm:$0xff]
    %v43 = vld [vmem:[#allocation2 + $0x18] sm:$0xff]
    %v44 = vld [vmem:[#allocation2 + $0x20] sm:$0xff]
    %v45 = vld [vmem:[#allocation2 + $0x28] sm:$0xff]
    %v46 = vld [vmem:[#allocation2 + $0x30] sm:$0xff]
    %v47 = vld [vmem:[#allocation2 + $0x38] sm:$0xff]
    %v48 = vld [vmem:[#allocation2 + $0x40] sm:$0xff]
    %v49 = vld [vmem:[#allocation2 + $0x48] sm:$0xff]
    %v50 = vld [vmem:[#allocation2 + $0x50] sm:$0xff]
    %v51 = vld [vmem:[#allocation2 + $0x58] sm:$0xff]
    %v52 = vld [vmem:[#allocation2 + $0x60] sm:$0xff]
    %v53 = vld [vmem:[#allocation2 + $0x68] sm:$0xff]
    %v54 = vld [vmem:[#allocation2 + $0x70] sm:$0xff]
    %v55 = vld [vmem:[#allocation2 + $0x78] sm:$0xff]
    %v56 = vld [vmem:[#allocation5] sm:$0xff]
    %v57 = vld [vmem:[#allocation5 + $0x8] sm:$0xff]
    %v58 = vld [vmem:[#allocation5 + $0x10] sm:$0xff]
    %v59 = vld [vmem:[#allocation5 + $0x18] sm:$0xff]
    %v60 = vld [vmem:[#allocation5 + $0x20] sm:$0xff]
    %v61 = vld [vmem:[#allocation5 + $0x28] sm:$0xff]
    %v62 = vld [vmem:[#allocation5 + $0x30] sm:$0xff]
    %v63 = vld [vmem:[#allocation5 + $0x38] sm:$0xff]
    %v64 = vld [vmem:[#allocation5 + $0x40] sm:$0xff]
    %v65 = vld [vmem:[#allocation5 + $0x48] sm:$0xff]
    %v66 = vld [vmem:[#allocation5 + $0x50] sm:$0xff]
    %v67 = vld [vmem:[#allocation5 + $0x58] sm:$0xff]
    %v68 = vld [vmem:[#allocation5 + $0x60] sm:$0xff]
    %v69 = vld [vmem:[#allocation5 + $0x68] sm:$0xff]
    %v70 = vld [vmem:[#allocation5 + $0x70] sm:$0xff]
    %v71 = vld [vmem:[#allocation5 + $0x78] sm:$0xff]
    %72 = vmatprep.subr.mxu0 0.0
    %73 = vmatpush1.msra.mxu0 %v71
    %74 = vmatprep.subr.mxu0 0.0
    %75 = vmatpush1.msra.mxu0 %v70
    %76 = vmatprep.subr.mxu0 0.0
    %77 = vmatpush1.msra.mxu0 %v69
    %78 = vmatprep.subr.mxu0 0.0
    %79 = vmatpush1.msra.mxu0 %v68
    %80 = vmatprep.subr.mxu0 0.0
    %81 = vmatpush1.msra.mxu0 %v67
    %82 = vmatprep.subr.mxu0 0.0
    %83 = vmatpush1.msra.mxu0 %v66
    %84 = vmatprep.subr.mxu0 0.0
    %85 = vmatpush1.msra.mxu0 %v65
    %86 = vmatprep.subr.mxu0 0.0
    %87 = vmatpush1.msra.mxu0 %v64
    %88 = vmatprep.subr.mxu0 0.0
    %89 = vmatpush1.msra.mxu0 %v63
    %90 = vmatprep.subr.mxu0 0.0
    %91 = vmatpush1.msra.mxu0 %v62
    %92 = vmatprep.subr.mxu0 0.0
    %93 = vmatpush1.msra.mxu0 %v61
    %94 = vmatprep.subr.mxu0 0.0
    %95 = vmatpush1.msra.mxu0 %v60
    %96 = vmatprep.subr.mxu0 0.0
    %97 = vmatpush1.msra.mxu0 %v59
    %98 = vmatprep.subr.mxu0 0.0
    %99 = vmatpush1.msra.mxu0 %v58
    %100 = vmatprep.subr.mxu0 0.0
    %101 = vmatpush1.msra.mxu0 %v57
    %102 = vmatprep.subr.mxu0 0.0
    %103 = vmatpush1.msra.mxu0 %v56
    %104 = vmatprep.subr.mxu0 0.0
    %105 = vmatpush2.msra.mxu0 0.0
    %106 = vmatprep.subr.mxu0 0.0
    %107 = vmatpush2.msra.mxu0 0.0
    %108 = vmatprep.subr.mxu0 0.0
    %109 = vmatpush2.msra.mxu0 0.0
    %110 = vmatprep.subr.mxu0 0.0
    %111 = vmatpush2.msra.mxu0 0.0
    %112 = vmatprep.subr.mxu0 0.0
    %113 = vmatpush2.msra.mxu0 0.0
    %114 = vmatprep.subr.mxu0 0.0
    %115 = vmatpush2.msra.mxu0 0.0
    %116 = vmatprep.subr.mxu0 0.0
    %117 = vmatpush2.msra.mxu0 0.0
    %118 = vmatprep.subr.mxu0 0.0
    %119 = vmatpush2.msra.mxu0 0.0
    %120 = vmatprep.subr.mxu0 0.0
    %121 = vmatpush2.msra.mxu0 0.0
    %122 = vmatprep.subr.mxu0 0.0
    %123 = vmatpush2.msra.mxu0 0.0
    %124 = vmatprep.subr.mxu0 0.0
    %125 = vmatpush2.msra.mxu0 0.0
    %126 = vmatprep.subr.mxu0 0.0
    %127 = vmatpush2.msra.mxu0 0.0
    %128 = vmatprep.subr.mxu0 0.0
    %129 = vmatpush2.msra.mxu0 0.0
    %130 = vmatprep.subr.mxu0 0.0
    %131 = vmatpush2.msra.mxu0 0.0
    %132 = vmatprep.subr.mxu0 0.0
    %133 = vmatpush2.msra.mxu0 0.0
    %134 = vmatprep.subr.mxu0 0.0
    %135 = vmatpush2.msra.mxu0 0.0
    %136 = vmatprep.mubr.f32.mxu0 0.0
    %137 = vmatmul.mubr.f32.gmra.mxu0 %v40
    %v138 = vpop.f32.mrf.mxu0
    %v139 = vadd.f32 0.0, %v138
    %v140 = vpop.f32.mrf.mxu0
    %141 = vmatprep.mubr.f32.mxu0 0.0
    %142 = vmatmul.mubr.f32.gmra.mxu0 %v41
    %v143 = vpop.f32.mrf.mxu0
    %v144 = vadd.f32 0.0, %v143
    %v145 = vpop.f32.mrf.mxu0
    %146 = vmatprep.mubr.f32.mxu0 0.0
    %147 = vmatmul.mubr.f32.gmra.mxu0 %v42
    %v148 = vpop.f32.mrf.mxu0
    %v149 = vadd.f32 0.0, %v148
    %v150 = vpop.f32.mrf.mxu0
    %151 = vmatprep.mubr.f32.mxu0 0.0
    %152 = vmatmul.mubr.f32.gmra.mxu0 %v43
    %v153 = vpop.f32.mrf.mxu0
    %v154 = vadd.f32 0.0, %v153
    %v155 = vpop.f32.mrf.mxu0
    %156 = vmatprep.mubr.f32.mxu0 0.0
    %157 = vmatmul.mubr.f32.gmra.mxu0 %v44
    %v158 = vpop.f32.mrf.mxu0
    %v159 = vadd.f32 0.0, %v158
    %v160 = vpop.f32.mrf.mxu0
    %161 = vmatprep.mubr.f32.mxu0 0.0
    %162 = vmatmul.mubr.f32.gmra.mxu0 %v45
    %v163 = vpop.f32.mrf.mxu0
    %v164 = vadd.f32 0.0, %v163
    %v165 = vpop.f32.mrf.mxu0
    %166 = vmatprep.mubr.f32.mxu0 0.0
    %167 = vmatmul.mubr.f32.gmra.mxu0 %v46
    %v168 = vpop.f32.mrf.mxu0
    %v169 = vadd.f32 0.0, %v168
    %v170 = vpop.f32.mrf.mxu0
    %171 = vmatprep.mubr.f32.mxu0 0.0
    %172 = vmatmul.mubr.f32.gmra.mxu0 %v47
    %v173 = vpop.f32.mrf.mxu0
    %v174 = vadd.f32 0.0, %v173
    %v175 = vpop.f32.mrf.mxu0
    %176 = vmatprep.mubr.f32.mxu0 0.0
    %177 = vmatmul.mubr.f32.gmra.mxu0 %v48
    %v178 = vpop.f32.mrf.mxu0
    %v179 = vadd.f32 0.0, %v178
    %v180 = vpop.f32.mrf.mxu0
    %181 = vmatprep.mubr.f32.mxu0 0.0
    %182 = vmatmul.mubr.f32.gmra.mxu0 %v49
    %v183 = vpop.f32.mrf.mxu0
    %v184 = vadd.f32 0.0, %v183
    %v185 = vpop.f32.mrf.mxu0
    %186 = vmatprep.mubr.f32.mxu0 0.0
    %187 = vmatmul.mubr.f32.gmra.mxu0 %v50
    %v188 = vpop.f32.mrf.mxu0
    %v189 = vadd.f32 0.0, %v188
    %v190 = vpop.f32.mrf.mxu0
    %191 = vmatprep.mubr.f32.mxu0 0.0
    %192 = vmatmul.mubr.f32.gmra.mxu0 %v51
    %v193 = vpop.f32.mrf.mxu0
    %v194 = vadd.f32 0.0, %v193
    %v195 = vpop.f32.mrf.mxu0
    %196 = vmatprep.mubr.f32.mxu0 0.0
    %197 = vmatmul.mubr.f32.gmra.mxu0 %v52
    %v198 = vpop.f32.mrf.mxu0
    %v199 = vadd.f32 0.0, %v198
    %v200 = vpop.f32.mrf.mxu0
    %201 = vmatprep.mubr.f32.mxu0 0.0
    %202 = vmatmul.mubr.f32.gmra.mxu0 %v53
    %v203 = vpop.f32.mrf.mxu0
    %v204 = vadd.f32 0.0, %v203
    %v205 = vpop.f32.mrf.mxu0
    %206 = vmatprep.mubr.f32.mxu0 0.0
    %207 = vmatmul.mubr.f32.gmra.mxu0 %v54
    %v208 = vpop.f32.mrf.mxu0
    %v209 = vadd.f32 0.0, %v208
    %v210 = vpop.f32.mrf.mxu0
    %211 = vmatprep.mubr.f32.mxu0 0.0
    %212 = vmatmul.mubr.f32.gmra.mxu0 %v55
    %v213 = vpop.f32.mrf.mxu0
    %v214 = vadd.f32 0.0, %v213
    %v215 = vpop.f32.mrf.mxu0
    %216 = vdwg.mxu0
    %v217 = vpack.c.bf16 %v144, %v139
    %v218 = vpack.c.bf16 %v154, %v149
    %v219 = vpack.c.bf16 %v164, %v159
    %v220 = vpack.c.bf16 %v174, %v169
    %v221 = vpack.c.bf16 %v184, %v179
    %v222 = vpack.c.bf16 %v194, %v189
    %v223 = vpack.c.bf16 %v204, %v199
    %v224 = vpack.c.bf16 %v214, %v209
    %v233 = vunpack.c.l.b16 %v217
    %v234 = vunpack.c.h.b16 %v217
    %v235 = vunpack.c.l.b16 %v218
    %v236 = vunpack.c.h.b16 %v218
    %v237 = vunpack.c.l.b16 %v219
    %v238 = vunpack.c.h.b16 %v219
    %v239 = vunpack.c.l.b16 %v220
    %v240 = vunpack.c.h.b16 %v220
    %v241 = vunpack.c.l.b16 %v221
    %v242 = vunpack.c.h.b16 %v221
    %v243 = vunpack.c.l.b16 %v222
    %v244 = vunpack.c.h.b16 %v222
    %v245 = vunpack.c.l.b16 %v223
    %v246 = vunpack.c.h.b16 %v223
    %v247 = vunpack.c.l.b16 %v224
    %v248 = vunpack.c.h.b16 %v224
    %v249 = vpack.c.b16 %v233, %v233
    %v250 = vpack.c.b16 %v234, %v234
    %v251 = vpack.c.b16 %v235, %v235
    %v252 = vpack.c.b16 %v236, %v236
    %v253 = vpack.c.b16 %v237, %v237
    %v254 = vpack.c.b16 %v238, %v238
    %v255 = vpack.c.b16 %v239, %v239
    %v256 = vpack.c.b16 %v240, %v240
    %v257 = vpack.c.b16 %v241, %v241
    %v258 = vpack.c.b16 %v242, %v242
    %v259 = vpack.c.b16 %v243, %v243
    %v260 = vpack.c.b16 %v244, %v244
    %v261 = vpack.c.b16 %v245, %v245
    %v262 = vpack.c.b16 %v246, %v246
    %v263 = vpack.c.b16 %v247, %v247
    %v264 = vpack.c.b16 %v248, %v248
    %281 = vst [vmem:[#allocation7] sm:$0xf] %v249
    %282 = vst [vmem:[#allocation7 + $0x4] sm:$0xf] %v250
    %283 = vst [vmem:[#allocation7 + $0x8] sm:$0xf] %v251
    %284 = vst [vmem:[#allocation7 + $0xc] sm:$0xf] %v252
    %285 = vst [vmem:[#allocation7 + $0x10] sm:$0xf] %v253
    %286 = vst [vmem:[#allocation7 + $0x14] sm:$0xf] %v254
    %287 = vst [vmem:[#allocation7 + $0x18] sm:$0xf] %v255
    %288 = vst [vmem:[#allocation7 + $0x1c] sm:$0xf] %v256
    %289 = vst [vmem:[#allocation7 + $0x20] sm:$0xf] %v257
    %290 = vst [vmem:[#allocation7 + $0x24] sm:$0xf] %v258
    %291 = vst [vmem:[#allocation7 + $0x28] sm:$0xf] %v259
    %292 = vst [vmem:[#allocation7 + $0x2c] sm:$0xf] %v260
    %293 = vst [vmem:[#allocation7 + $0x30] sm:$0xf] %v261
    %294 = vst [vmem:[#allocation7 + $0x34] sm:$0xf] %v262
    %295 = vst [vmem:[#allocation7 + $0x38] sm:$0xf] %v263
    %296 = vst [vmem:[#allocation7 + $0x3c] sm:$0xf] %v264
    // Predicated region
    $region18: #{tpu_custom_call.1} parent=1 // pred_check
      _
    $region19: #{tpu_custom_call.1} parent=1 // pred_check_branch
      %298 = sbr.rel (0) target = $region21
    $region20: #{tpu_custom_call.1} parent=1 // pred_region
      %s300 = ssub.s32 1024, 1024
      %301 = vsyncadd [#allocation4], %s300
      %s302 = sshll.u32 [#allocation7], 4
      %s303 = int_to_ptr.vmem [resolvable:$true] %s302
      %308 = dma.vmem_to_hbm [thread:$0]  %s303, 1024, %s2, [#allocation4], 64, 64, 4
    $region21: #{tpu_custom_call.1} parent=1 // pred_fallthru
      _
    // Predicated region
    $region22: #{tpu_custom_call.1} parent=1 // pred_check
      _
    $region23: #{tpu_custom_call.1} parent=1 // pred_check_branch
      %310 = sbr.rel (0) target = $region25
    $region24: #{tpu_custom_call.1} parent=1 // pred_region
      %311 = dma.done [#allocation4], 1024
    $region25: #{tpu_custom_call.1} parent=1 // pred_fallthru
      _
    %312 = vsyncpa [#allocation3], 1
    %313 = vsyncpa [#allocation6], 1
    %314 = vsyncpa [#allocation4], 1

</llo_original>
